<compile_context>
chip_gen: v6e
topology: v6e:2x2x1
jax: 0.10.0
libtpu: 0.0.40
codegen_flags: <defaults>
</compile_context>

<pallas_src>
import jax
import jax.numpy as jnp
from jax.experimental import pallas as pl
from jax.experimental.pallas import tpu as pltpu

BLOCKSIZE = 8      # T (max sequence length / position table size)
N_EMBED = 32       # E
VOCAB_SIZE = 65    # deterministic stand-in for len(sorted(set(text)))

_LANE = 128
VOCAB_PADDED = ((VOCAB_SIZE + _LANE - 1) // _LANE) * _LANE   # 128
_NEG_BIG = -1e30   # finite "minus infinity": exp() underflows to 0, 0*x == 0
MAX_TILE_BT = 1024 # rows per grid step at scale (amortizes per-step overhead)

assert VOCAB_SIZE + BLOCKSIZE <= VOCAB_PADDED

# Bit-packing of per-row integers into a single int32 code:
#   code = idx | (pos << 7) | ((tgt + 1) << 10)      (tgt+1 == 0 marks padding)
_IDX_BITS = 7
_POS_BITS = 3


def _round_up(x, m):
    return (x + m - 1) // m * m


def _bigram_kernel(code_ref, table_ref, logits_ref, loss_part_ref):
    # code_ref:      (TILE_BT, 1) int32  -- packed idx/pos/target per row
    # table_ref:     (VP, VP)     f32    -- combined tok/pos logits table
    # logits_ref:    (TILE_BT, VP) f32   -- lane-dense, unmasked stores
    # loss_part_ref: (1, 1, VP)   f32    -- per-tile partial loss sum (bcast)
    tile_bt, vp = logits_ref.shape

    code = code_ref[...]                                       # (TILE, 1)
    idx = code & ((1 << _IDX_BITS) - 1)                        # token id
    pos = (code >> _IDX_BITS) & ((1 << _POS_BITS) - 1)         # position id
    tgt = (code >> (_IDX_BITS + _POS_BITS)) - 1                # target (-1 = pad)

    lane_iota = jax.lax.broadcasted_iota(jnp.int32, (tile_bt, vp), 1)

    # Two-hot row: 1 at column `idx` (token row of the table) and 1 at column
    # `VOCAB_SIZE + pos` (position row).  One K=128, N=128 MXU matmul gives
    # logits = tok_table[idx] @ W^T + b + pos_table[pos] @ W^T, with padded
    # columns carrying -1e30 (folded into the table).
    two_hot = jnp.logical_or(lane_iota == idx,
                             lane_iota == (pos + VOCAB_SIZE)).astype(jnp.float32)
    logits = jnp.dot(two_hot, table_ref[...],
                     preferred_element_type=jnp.float32)       # (TILE, VP)
    logits_ref[...] = logits

    # Cross entropy partial sum (padded lanes never win the max and exp()
    # underflows to exactly 0; padded tail rows are masked via tgt == -1).
    m = jnp.max(logits, axis=-1, keepdims=True)                # (TILE, 1)
    lse = m + jnp.log(jnp.sum(jnp.exp(logits - m), axis=-1, keepdims=True))
    tgt_oh = (lane_iota == tgt).astype(jnp.float32)            # (TILE, VP)
    picked = jnp.sum(logits * tgt_oh, axis=-1, keepdims=True)  # (TILE, 1)
    valid = (tgt >= 0).astype(jnp.float32)                     # (TILE, 1)
    partial = jnp.sum((lse - picked) * valid)                  # scalar
    loss_part_ref[...] = jnp.broadcast_to(partial, loss_part_ref.shape)


def prepare_params(tok_table, pos_table, w_head, b_head):
    """One-time parameter prep: fold embeddings + lm_head into one table.

    Returns a (VOCAB_PADDED, VOCAB_PADDED) f32 table:
      rows [0, V)        : tok_table @ W^T + b   (padded columns = -1e30)
      rows [V, V+P)      : pos_table @ W^T       (padded columns = 0)
      remaining rows     : 0
    Do this once per weight update / at load time, NOT per forward call.
    """
    V, E = tok_table.shape
    P = pos_table.shape[0]
    VP = VOCAB_PADDED
    hi = jax.lax.Precision.HIGHEST

    wt = w_head.astype(jnp.float32).T                                  # (E, V)
    tok_logits = (jnp.dot(tok_table.astype(jnp.float32), wt, precision=hi)
                  + b_head.astype(jnp.float32)[None, :])               # (V, V)
    pos_logits = jnp.dot(pos_table.astype(jnp.float32), wt, precision=hi)  # (P, V)

    tok_block = jnp.concatenate(
        [tok_logits, jnp.full((V, VP - V), _NEG_BIG, jnp.float32)], axis=1)
    pos_block = jnp.pad(pos_logits, ((0, 0), (0, VP - V)))
    zero_block = jnp.zeros((VP - V - P, VP), jnp.float32)
    return jnp.concatenate([tok_block, pos_block, zero_block], axis=0)  # (VP, VP)


def bigram_forward(idx, targets, table_pad, *, max_tile_bt=MAX_TILE_BT):
    """Runs the Pallas kernel. Returns (logits (B,T,V) f32, loss scalar f32)."""
    B, T = idx.shape
    BT = B * T
    VP = table_pad.shape[1]

    tile_bt = min(max_tile_bt, _round_up(BT, 8))
    bt_pad = _round_up(BT, tile_bt)
    num_tiles = bt_pad // tile_bt

    idx_flat = idx.reshape(BT).astype(jnp.int32)
    tgt_flat = targets.reshape(BT).astype(jnp.int32)
    pos_flat = jnp.tile(jnp.arange(T, dtype=jnp.int32), B)     # actual T
    code = (idx_flat
            | (pos_flat << _IDX_BITS)
            | ((tgt_flat + 1) << (_IDX_BITS + _POS_BITS)))
    if bt_pad > BT:   # tail padding: code 0 -> idx=0, pos=0, tgt=-1 (masked)
        code = jnp.concatenate([code, jnp.zeros((bt_pad - BT,), jnp.int32)])
    code = code.reshape(bt_pad, 1)

    logits_pad, loss_parts = pl.pallas_call(
        _bigram_kernel,
        grid=(num_tiles,),
        in_specs=[
            pl.BlockSpec((tile_bt, 1), lambda i: (i, 0)),      # per-tile rows
            pl.BlockSpec((VP, VP), lambda i: (0, 0)),          # resident table
        ],
        out_specs=(
            pl.BlockSpec((tile_bt, VP), lambda i: (i, 0)),     # lane-dense logits
            pl.BlockSpec((1, 1, VP), lambda i: (i, 0, 0)),     # per-tile loss
        ),
        out_shape=(
            jax.ShapeDtypeStruct((bt_pad, VP), jnp.float32),
            jax.ShapeDtypeStruct((num_tiles, 1, VP), jnp.float32),
        ),
        compiler_params=pltpu.CompilerParams(
            dimension_semantics=("parallel",)),                # v7x megacore
    )(code, table_pad)

    logits = logits_pad[:BT, :VOCAB_SIZE].reshape(B, T, VOCAB_SIZE)
    loss = jnp.sum(loss_parts[:, 0, 0]) / BT                   # true-BT mean
    return logits, loss


def reference_forward(idx, targets, tok_table, pos_table, w_head, b_head):
    """Pure-JAX reference mirroring the PyTorch module."""
    B, T = idx.shape
    hi = jax.lax.Precision.HIGHEST
    tok_emb = tok_table[idx]                      # (B, T, E)
    pos_emb = pos_table[jnp.arange(T)]            # (T, E)
    emb = tok_emb + pos_emb[None, :, :]
    logits = jnp.dot(emb, w_head.T, precision=hi) + b_head     # (B, T, V)
    lf = logits.reshape(B * T, -1)
    tf = targets.reshape(B * T)
    lse = jax.scipy.special.logsumexp(lf, axis=-1)
    picked = lf[jnp.arange(B * T), tf]
    loss = jnp.mean(lse - picked)
    return logits, loss


def _check(idx, targets, table_pad, params, **kw):
    logits, loss = bigram_forward(idx, targets, table_pad, **kw)
    jax.block_until_ready((logits, loss))
    ref_logits, ref_loss = reference_forward(idx, targets, *params)
    B, T = idx.shape
    assert logits.shape == (B, T, VOCAB_SIZE)
    assert jnp.allclose(logits, ref_logits, atol=1e-4, rtol=1e-4)
    assert jnp.allclose(loss, ref_loss, atol=1e-4, rtol=1e-4)


if __name__ == "__main__":
    key = jax.random.PRNGKey(0)
    k1, k2, k3, k4, k5, k6, k7, k8 = jax.random.split(key, 8)

    # Deterministic synthetic parameters (shapes from the module __init__).
    tok_table = jax.random.normal(k1, (VOCAB_SIZE, N_EMBED), jnp.float32)
    pos_table = jax.random.normal(k2, (BLOCKSIZE, N_EMBED), jnp.float32)
    w_head = jax.random.normal(k3, (VOCAB_SIZE, N_EMBED), jnp.float32) * 0.1
    b_head = jax.random.normal(k4, (VOCAB_SIZE,), jnp.float32) * 0.1
    params = (tok_table, pos_table, w_head, b_head)

    # One-time param prep (combined logits table) hoisted out of the hot path.
    table_pad = prepare_params(*params)

    # --- main check: B=2, T=BLOCKSIZE (training-style shapes) ---
    B, T = 2, BLOCKSIZE
    idx = jax.random.randint(k5, (B, T), 0, VOCAB_SIZE, jnp.int32)
    targets = jax.random.randint(k6, (B, T), 0, VOCAB_SIZE, jnp.int32)
    _check(idx, targets, table_pad, params)

    # --- secondary check: T < BLOCKSIZE (generation-path context slice) ---
    idx2 = jax.random.randint(k7, (2, 5), 0, VOCAB_SIZE, jnp.int32)
    targets2 = jax.random.randint(k8, (2, 5), 0, VOCAB_SIZE, jnp.int32)
    _check(idx2, targets2, table_pad, params)

    # --- grid/pipeline check: force multiple tiles + a masked tail row ---
    _check(idx, targets, table_pad, params, max_tile_bt=8)       # 2 tiles
    idx3 = jax.random.randint(k7, (3, 5), 0, VOCAB_SIZE, jnp.int32)
    targets3 = jax.random.randint(k8, (3, 5), 0, VOCAB_SIZE, jnp.int32)
    _check(idx3, targets3, table_pad, params, max_tile_bt=8)      # 15 rows -> pad 16

    print("KERNEL_OK")
</pallas_src>

<mosaic_0001>
module attributes {stable_mosaic.version = 11 : i64} {
  func.func @_bigram_kernel(%arg0: i32, %arg1: memref<16x1xi32, #tpu.memory_space<vmem>>, %arg2: memref<128x128xf32, #tpu.memory_space<vmem>>, %arg3: memref<16x128xf32, #tpu.memory_space<vmem>>, %arg4: memref<1x1x128xf32, #tpu.memory_space<vmem>>) attributes {dimension_semantics = [#tpu.dimension_semantics<parallel>], iteration_bounds = array<i64: 1>, scalar_prefetch = 0 : i64, scratch_operands = 0 : i64, tpu.core_type = #tpu.core_type<tc>, window_params = [{transform_indices = @transform_0, window_bounds = array<i64: 16, 1>}, {pipeline_mode = #tpu.pipeline_mode<synchronous>, transform_indices = @transform_1, window_bounds = array<i64: 128, 128>}, {transform_indices = @transform_2, window_bounds = array<i64: 16, 128>}, {transform_indices = @transform_3, window_bounds = array<i64: 1, 1, 128>}]} {
    %c0 = arith.constant 0 : index
    %c0_0 = arith.constant 0 : index
    %0 = vector.load %arg1[%c0, %c0_0] : memref<16x1xi32, #tpu.memory_space<vmem>>, vector<16x1xi32>
    %c127_i32 = arith.constant 127 : i32
    %1 = vector.broadcast %c127_i32 : i32 to vector<16x1xi32>
    %2 = arith.andi %0, %1 : vector<16x1xi32>
    %c7_i32 = arith.constant 7 : i32
    %3 = vector.broadcast %c7_i32 : i32 to vector<16x1xi32>
    %4 = arith.shrsi %0, %3 : vector<16x1xi32>
    %c7_i32_1 = arith.constant 7 : i32
    %5 = vector.broadcast %c7_i32_1 : i32 to vector<16x1xi32>
    %6 = arith.andi %4, %5 : vector<16x1xi32>
    %c10_i32 = arith.constant 10 : i32
    %7 = vector.broadcast %c10_i32 : i32 to vector<16x1xi32>
    %8 = arith.shrsi %0, %7 : vector<16x1xi32>
    %c1_i32 = arith.constant 1 : i32
    %9 = vector.broadcast %c1_i32 : i32 to vector<16x1xi32>
    %10 = arith.subi %8, %9 : vector<16x1xi32>
    %11 = tpu.iota {dimensions = array<i32: 1>} : vector<16x128xi32>
    %12 = vector.broadcast %2 : vector<16x1xi32> to vector<16x128xi32>
    %13 = arith.cmpi eq, %11, %12 : vector<16x128xi32>
    %c65_i32 = arith.constant 65 : i32
    %14 = vector.broadcast %c65_i32 : i32 to vector<16x1xi32>
    %15 = arith.addi %6, %14 : vector<16x1xi32>
    %16 = vector.broadcast %15 : vector<16x1xi32> to vector<16x128xi32>
    %17 = arith.cmpi eq, %11, %16 : vector<16x128xi32>
    %18 = arith.ori %13, %17 : vector<16x128xi1>
    %19 = arith.extui %18 : vector<16x128xi1> to vector<16x128xi32>
    %20 = arith.sitofp %19 : vector<16x128xi32> to vector<16x128xf32>
    %c0_2 = arith.constant 0 : index
    %c0_3 = arith.constant 0 : index
    %21 = vector.load %arg2[%c0_2, %c0_3] : memref<128x128xf32, #tpu.memory_space<vmem>>, vector<128x128xf32>
    %cst = arith.constant dense<0.000000e+00> : vector<16x128xf32>
    %22 = tpu.matmul %20, %21, %cst {dimension_numbers = #tpu.dot_dimension_numbers<[1], [0], [0], [1], [0, 0, 1, 1], [], []>} : vector<16x128xf32>, vector<128x128xf32>, vector<16x128xf32> -> vector<16x128xf32>
    %c0_4 = arith.constant 0 : index
    %c0_5 = arith.constant 0 : index
    %23 = vector.load %arg3[%c0_4, %c0_5] : memref<16x128xf32, #tpu.memory_space<vmem>>, vector<16x128xf32>
    tpu.vector_store %arg3[%c0_4, %c0_5], %22 {strides = array<i32>} : memref<16x128xf32, #tpu.memory_space<vmem>>, vector<16x128xf32>,
    %cst_6 = arith.constant dense<0xFF800000> : vector<16xf32>
    %24 = vector.multi_reduction <maximumf>, %22, %cst_6 [1] : vector<16x128xf32> to vector<16xf32>
    %25 = vector.shape_cast %24 : vector<16xf32> to vector<16x1xf32>
    %26 = vector.broadcast %25 : vector<16x1xf32> to vector<16x128xf32>
    %27 = arith.subf %22, %26 : vector<16x128xf32>
    %28 = math.exp %27 : vector<16x128xf32>
    %cst_7 = arith.constant dense<0.000000e+00> : vector<16xf32>
    %29 = vector.multi_reduction <add>, %28, %cst_7 [1] : vector<16x128xf32> to vector<16xf32>
    %30 = vector.shape_cast %29 : vector<16xf32> to vector<16x1xf32>
    %31 = math.log %30 : vector<16x1xf32>
    %32 = arith.addf %25, %31 : vector<16x1xf32>
    %33 = vector.broadcast %10 : vector<16x1xi32> to vector<16x128xi32>
    %34 = arith.cmpi eq, %11, %33 : vector<16x128xi32>
    %35 = arith.extui %34 : vector<16x128xi1> to vector<16x128xi32>
    %36 = arith.sitofp %35 : vector<16x128xi32> to vector<16x128xf32>
    %37 = arith.mulf %22, %36 : vector<16x128xf32>
    %cst_8 = arith.constant dense<0.000000e+00> : vector<16xf32>
    %38 = vector.multi_reduction <add>, %37, %cst_8 [1] : vector<16x128xf32> to vector<16xf32>
    %39 = vector.shape_cast %38 : vector<16xf32> to vector<16x1xf32>
    %c0_i32 = arith.constant 0 : i32
    %40 = vector.broadcast %c0_i32 : i32 to vector<16x1xi32>
    %41 = arith.cmpi sge, %10, %40 : vector<16x1xi32>
    %42 = arith.extui %41 : vector<16x1xi1> to vector<16x1xi32>
    %43 = arith.sitofp %42 : vector<16x1xi32> to vector<16x1xf32>
    %44 = arith.subf %32, %39 : vector<16x1xf32>
    %45 = arith.mulf %44, %43 : vector<16x1xf32>
    %46 = vector.shape_cast %45 : vector<16x1xf32> to vector<1x16x1xf32>
    %cst_9 = arith.constant dense<0.000000e+00> : vector<1xf32>
    %47 = vector.multi_reduction <add>, %46, %cst_9 [1, 2] : vector<1x16x1xf32> to vector<1xf32>
    %48 = vector.shape_cast %47 : vector<1xf32> to vector<1x1x1xf32>
    %49 = vector.extract %48[0, 0, 0] : f32 from vector<1x1x1xf32>
    %50 = vector.broadcast %49 : f32 to vector<1x1x128xf32>
    %c0_10 = arith.constant 0 : index
    %c0_11 = arith.constant 0 : index
    %c0_12 = arith.constant 0 : index
    %51 = vector.load %arg4[%c0_10, %c0_11, %c0_12] : memref<1x1x128xf32, #tpu.memory_space<vmem>>, vector<1x1x128xf32>
    tpu.vector_store %arg4[%c0_10, %c0_11, %c0_12], %50 {strides = array<i32>} : memref<1x1x128xf32, #tpu.memory_space<vmem>>, vector<1x1x128xf32>,
    return
  }
  func.func @transform_0(%arg0: i32) -> (i32, i32) {
    %c0_i32 = arith.constant 0 : i32
    %c0_i32_0 = arith.constant 0 : i32
    return %arg0, %c0_i32 : i32, i32
  }
  func.func @transform_1(%arg0: i32) -> (i32, i32) {
    %c0_i32 = arith.constant 0 : i32
    %c0_i32_0 = arith.constant 0 : i32
    %c0_i32_1 = arith.constant 0 : i32
    return %c0_i32, %c0_i32_0 : i32, i32
  }
  func.func @transform_2(%arg0: i32) -> (i32, i32) {
    %c0_i32 = arith.constant 0 : i32
    %c0_i32_0 = arith.constant 0 : i32
    return %arg0, %c0_i32 : i32, i32
  }
  func.func @transform_3(%arg0: i32) -> (i32, i32, i32) {
    %c0_i32 = arith.constant 0 : i32
    %c0_i32_0 = arith.constant 0 : i32
    %c0_i32_1 = arith.constant 0 : i32
    return %arg0, %c0_i32, %c0_i32_0 : i32, i32, i32
  }
}

</mosaic_0001>

<llo_original>
// kernel: tpu_custom_call.1
$region0: #{tpu_custom_call.1}
  #allocation0 [shape = 'u32[]', space=smem, size = 0x4, offset = 0x4, fixed_abs, tag = 'smem constant byte address 0x4 - core index']
  #allocation1 [shape = 'u32[144,128]{1,0:T(1,128)}', space=vmem, size = 0x12000, scoped, tag = 'internal scratch']
  %s0 = inlined_call_operand.vmem [shape: s32[16,1], index: 0, kind: input, shape index: {}]
  %s1 = inlined_call_operand.hbm [shape: f32[128,128], index: 1, kind: input, shape index: {}]
  %s2 = inlined_call_operand.hbm [shape: f32[16,128], index: 2, kind: output, shape index: {0}]
  %s3 = inlined_call_operand.hbm [shape: f32[1,1,128], index: 3, kind: output, shape index: {1}]
  %4 = xla_tuple %s2, %s3
  %s5 = sld [smem:[#allocation0]]
  $region30: #{tpu_custom_call.1} parent=0
    _
  %s7 = ssub.s32 1, %s5
  %s8 = scalar_select 0, %s7, %s5
  $region1: #{tpu_custom_call.1} parent=0
    #allocation2 [shape = 'u8[65536]{0}', space=vmem, size = 0x10000, scoped, tag = 'input window, operand 1, single buffered']
    #allocation3 [shape = 's32[1]{0}', space=sflag, size = 0x4, scoped, tag = 'scoped memory for tpu_custom_call.1']
    #allocation4 [shape = 's32[1]{0}', space=sflag, size = 0x4, scoped, tag = 'scoped memory for tpu_custom_call.1']
    #allocation5 [shape = 'u8[8192]{0}', space=vmem, size = 0x2000, scoped, tag = 'output window, operand 0, single buffered']
    #allocation6 [shape = 'u8[512]{0}', space=vmem, size = 0x400, scoped, tag = 'output window, operand 1, single buffered']
    #allocation7 [shape = 's32[1]{0}', space=sflag, size = 0x4, scoped, tag = 'scoped memory for tpu_custom_call.1']
    %9 = vsyncpa [#allocation3], 0
    %10 = vsyncpa [#allocation4], 0
    %11 = vsyncpa [#allocation7], 0
    // Predicated region
    $region2: #{tpu_custom_call.1} parent=1 // pred_check
      _
    $region3: #{tpu_custom_call.1} parent=1 // pred_check_branch
      %13 = sbr.rel (0) target = $region5
    $region4: #{tpu_custom_call.1} parent=1 // pred_region
      _
    $region5: #{tpu_custom_call.1} parent=1 // pred_fallthru
      _
    // Predicated region
    $region6: #{tpu_custom_call.1} parent=1 // pred_check
      _
    $region7: #{tpu_custom_call.1} parent=1 // pred_check_branch
      %15 = sbr.rel (0) target = $region9
    $region8: #{tpu_custom_call.1} parent=1 // pred_region
      %s17 = ssub.s32 2048, 2048
      %18 = vsyncadd [#allocation3], %s17
      %s19 = sshll.u32 [#allocation2], 4
      %s20 = int_to_ptr.vmem [resolvable:$true] %s19
      %25 = dma.hbm_to_vmem [thread:$0]  %s1, 2048, %s20, [#allocation3], 128, 128, 8
    $region9: #{tpu_custom_call.1} parent=1 // pred_fallthru
      _
    // Predicated region
    $region10: #{tpu_custom_call.1} parent=1 // pred_check
      _
    $region11: #{tpu_custom_call.1} parent=1 // pred_check_branch
      %27 = sbr.rel (0) target = $region13
    $region12: #{tpu_custom_call.1} parent=1 // pred_region
      %28 = dma.done [#allocation3], 2048
    $region13: #{tpu_custom_call.1} parent=1 // pred_fallthru
      _
    %v29 = vld [vmem:[%s0] sm:$0xff]
    %v30 = vld [vmem:[%s0 + $0x8] sm:$0xff]
    %v31 = vand.u32 %v29, 127
    %v32 = vand.u32 %v30, 127
    %v33 = vshra.s32 %v29, 7
    %v34 = vshra.s32 %v30, 7
    %v35 = vand.u32 %v33, 7
    %v36 = vand.u32 %v34, 7
    %v37 = vshra.s32 %v29, 10
    %v38 = vshra.s32 %v30, 10
    %v39 = vsub.s32 %v37, 1
    %v40 = vsub.s32 %v38, 1
    %v41 = vlaneseq
    %v42 = vand.u32 %v41, 127
    %43 = vset.pattern.permute.xlu0 0
    %44 = vperm.xlu0 %43, %v31
    %v45 = vpop.permute.xlu0 %44
    %46 = vset.pattern.permute.xlu0 0
    %47 = vperm.xlu0 %46, %v32
    %v48 = vpop.permute.xlu0 %47
    %vm49 = vcmp.eq.s32.totalorder %v42, %v45
    %vm50 = vcmp.eq.s32.totalorder %v42, %v48
    %v51 = vadd.s32 %v35, 65
    %v52 = vadd.s32 %v36, 65
    %53 = vset.pattern.permute.xlu0 0
    %54 = vperm.xlu0 %53, %v51
    %v55 = vpop.permute.xlu0 %54
    %56 = vset.pattern.permute.xlu0 0
    %57 = vperm.xlu0 %56, %v52
    %v58 = vpop.permute.xlu0 %57
    %vm59 = vcmp.eq.s32.totalorder %v42, %v55
    %vm60 = vcmp.eq.s32.totalorder %v42, %v58
    %vm61 = vmor %vm49, %vm59
    %vm62 = vmor %vm50, %vm60
    %v63 = vsel %vm61, 1, 0
    %v64 = vsel %vm62, 1, 0
    %v65 = vcvt.s32.f32 %v63
    %v66 = vcvt.s32.f32 %v64
    %v67 = vld [vmem:[#allocation2] sm:$0xff]
    %v68 = vld [vmem:[#allocation2 + $0x8] sm:$0xff]
    %v69 = vld [vmem:[#allocation2 + $0x10] sm:$0xff]
    %v70 = vld [vmem:[#allocation2 + $0x18] sm:$0xff]
    %v71 = vld [vmem:[#allocation2 + $0x20] sm:$0xff]
    %v72 = vld [vmem:[#allocation2 + $0x28] sm:$0xff]
    %v73 = vld [vmem:[#allocation2 + $0x30] sm:$0xff]
    %v74 = vld [vmem:[#allocation2 + $0x38] sm:$0xff]
    %v75 = vld [vmem:[#allocation2 + $0x40] sm:$0xff]
    %v76 = vld [vmem:[#allocation2 + $0x48] sm:$0xff]
    %v77 = vld [vmem:[#allocation2 + $0x50] sm:$0xff]
    %v78 = vld [vmem:[#allocation2 + $0x58] sm:$0xff]
    %v79 = vld [vmem:[#allocation2 + $0x60] sm:$0xff]
    %v80 = vld [vmem:[#allocation2 + $0x68] sm:$0xff]
    %v81 = vld [vmem:[#allocation2 + $0x70] sm:$0xff]
    %v82 = vld [vmem:[#allocation2 + $0x78] sm:$0xff]
    %83 = vmatprep.subr.mxu0 0.0
    %84 = vmatpush1.msra.mxu0 %v82
    %85 = vmatprep.subr.mxu0 0.0
    %86 = vmatpush1.msra.mxu0 %v81
    %87 = vmatprep.subr.mxu0 0.0
    %88 = vmatpush1.msra.mxu0 %v80
    %89 = vmatprep.subr.mxu0 0.0
    %90 = vmatpush1.msra.mxu0 %v79
    %91 = vmatprep.subr.mxu0 0.0
    %92 = vmatpush1.msra.mxu0 %v78
    %93 = vmatprep.subr.mxu0 0.0
    %94 = vmatpush1.msra.mxu0 %v77
    %95 = vmatprep.subr.mxu0 0.0
    %96 = vmatpush1.msra.mxu0 %v76
    %97 = vmatprep.subr.mxu0 0.0
    %98 = vmatpush1.msra.mxu0 %v75
    %99 = vmatprep.subr.mxu0 0.0
    %100 = vmatpush1.msra.mxu0 %v74
    %101 = vmatprep.subr.mxu0 0.0
    %102 = vmatpush1.msra.mxu0 %v73
    %103 = vmatprep.subr.mxu0 0.0
    %104 = vmatpush1.msra.mxu0 %v72
    %105 = vmatprep.subr.mxu0 0.0
    %106 = vmatpush1.msra.mxu0 %v71
    %107 = vmatprep.subr.mxu0 0.0
    %108 = vmatpush1.msra.mxu0 %v70
    %109 = vmatprep.subr.mxu0 0.0
    %110 = vmatpush1.msra.mxu0 %v69
    %111 = vmatprep.subr.mxu0 0.0
    %112 = vmatpush1.msra.mxu0 %v68
    %113 = vmatprep.subr.mxu0 0.0
    %114 = vmatpush1.msra.mxu0 %v67
    %115 = vmatprep.subr.mxu0 0.0
    %116 = vmatpush2.msra.mxu0 0.0
    %117 = vmatprep.subr.mxu0 0.0
    %118 = vmatpush2.msra.mxu0 0.0
    %119 = vmatprep.subr.mxu0 0.0
    %120 = vmatpush2.msra.mxu0 0.0
    %121 = vmatprep.subr.mxu0 0.0
    %122 = vmatpush2.msra.mxu0 0.0
    %123 = vmatprep.subr.mxu0 0.0
    %124 = vmatpush2.msra.mxu0 0.0
    %125 = vmatprep.subr.mxu0 0.0
    %126 = vmatpush2.msra.mxu0 0.0
    %127 = vmatprep.subr.mxu0 0.0
    %128 = vmatpush2.msra.mxu0 0.0
    %129 = vmatprep.subr.mxu0 0.0
    %130 = vmatpush2.msra.mxu0 0.0
    %131 = vmatprep.subr.mxu0 0.0
    %132 = vmatpush2.msra.mxu0 0.0
    %133 = vmatprep.subr.mxu0 0.0
    %134 = vmatpush2.msra.mxu0 0.0
    %135 = vmatprep.subr.mxu0 0.0
    %136 = vmatpush2.msra.mxu0 0.0
    %137 = vmatprep.subr.mxu0 0.0
    %138 = vmatpush2.msra.mxu0 0.0
    %139 = vmatprep.subr.mxu0 0.0
    %140 = vmatpush2.msra.mxu0 0.0
    %141 = vmatprep.subr.mxu0 0.0
    %142 = vmatpush2.msra.mxu0 0.0
    %143 = vmatprep.subr.mxu0 0.0
    %144 = vmatpush2.msra.mxu0 0.0
    %145 = vmatprep.subr.mxu0 0.0
    %146 = vmatpush2.msra.mxu0 0.0
    %147 = vmatprep.mubr.f32.mxu0 0.0
    %148 = vmatmul.mubr.f32.gmra.mxu0 %v65
    %v149 = vpop.f32.mrf.mxu0
    %v150 = vadd.f32 0.0, %v149
    %v151 = vpop.f32.mrf.mxu0
    %152 = vmatprep.mubr.f32.mxu0 0.0
    %153 = vmatmul.mubr.f32.gmra.mxu0 %v66
    %v154 = vpop.f32.mrf.mxu0
    %v155 = vadd.f32 0.0, %v154
    %v156 = vpop.f32.mrf.mxu0
    %157 = vdwg.mxu0
    %158 = vst [vmem:[#allocation5] sm:$0xff] %v150
    %159 = vst [vmem:[#allocation5 + $0x8] sm:$0xff] %v155
    %160 = vmax.xlane.f32.xlu0 %v150
    %v161 = vpop.xlane.xlu0 %160
    %162 = vmax.xlane.f32.xlu0 %v155
    %v163 = vpop.xlane.xlu0 %162
    %v164 = vsub.f32 %v150, %v161
    %v165 = vsub.f32 %v155, %v163
    %v166 = vmul.f32 %v164, 1.442695
    %v167 = vpow.pop %v166
    %v168 = vmul.f32 %v165, 1.442695
    %v169 = vpow.pop %v168
    %170 = vadd.xlane.f32.xlu0 %v167
    %v171 = vpop.xlane.xlu0 %170
    %172 = vadd.xlane.f32.xlu0 %v169
    %v173 = vpop.xlane.xlu0 %172
    %v174 = vlog2.pop %v171
    %v175 = vmul.f32 %v174, 0.6931472
    %v176 = vlog2.pop %v173
    %v177 = vmul.f32 %v176, 0.6931472
    %v178 = vadd.f32 %v161, %v175
    %v179 = vadd.f32 %v163, %v177
    %180 = vset.pattern.permute.xlu0 0
    %181 = vperm.xlu0 %180, %v39
    %v182 = vpop.permute.xlu0 %181
    %183 = vset.pattern.permute.xlu0 0
    %184 = vperm.xlu0 %183, %v40
    %v185 = vpop.permute.xlu0 %184
    %vm186 = vcmp.eq.s32.totalorder %v42, %v182
    %vm187 = vcmp.eq.s32.totalorder %v42, %v185
    %v188 = vsel %vm186, 1, 0
    %v189 = vsel %vm187, 1, 0
    %v190 = vcvt.s32.f32 %v188
    %v191 = vcvt.s32.f32 %v189
    %v192 = vmul.f32 %v150, %v190
    %v193 = vmul.f32 %v155, %v191
    %194 = vadd.xlane.f32.xlu0 %v192
    %v195 = vpop.xlane.xlu0 %194
    %196 = vadd.xlane.f32.xlu0 %v193
    %v197 = vpop.xlane.xlu0 %196
    %vm198 = vcmp.ge.s32.totalorder %v39, 0
    %vm199 = vcmp.ge.s32.totalorder %v40, 0
    %v200 = vsel %vm198, 1, 0
    %v201 = vsel %vm199, 1, 0
    %v202 = vcvt.s32.f32 %v200
    %v203 = vcvt.s32.f32 %v201
    %v204 = vsub.f32 %v178, %v195
    %v205 = vsub.f32 %v179, %v197
    %v206 = vmul.f32 %v204, %v202
    %v207 = vmul.f32 %v205, %v203
    %vm208 = vcmask 7168
    %v209 = vsel %vm208, %v206, 0.0
    %v210 = vsel %vm208, %v207, 0.0
    %v211 = vadd.f32 %v209, %v210
    %212 = vadd.xlane.f32.xlu0 %v211
    %v213 = vpop.xlane.xlu0 %212
    %v214 = vrot.slane %v213, 4
    %v215 = vadd.f32 %v213, %v214
    %v216 = vrot.slane %v215, 2
    %v217 = vadd.f32 %v215, %v216
    %v218 = vrot.slane %v217, 1
    %v219 = vadd.f32 %v217, %v218
    %s220 = vtos %v219
    %v221 = vstv %s220
    %222 = vst [vmem:[#allocation6] sm:$0x1] %v221
    // Predicated region
    $region14: #{tpu_custom_call.1} parent=1 // pred_check
      _
    $region15: #{tpu_custom_call.1} parent=1 // pred_check_branch
      %224 = sbr.rel (0) target = $region17
    $region16: #{tpu_custom_call.1} parent=1 // pred_region
      %s226 = ssub.s32 256, 256
      %227 = vsyncadd [#allocation4], %s226
      %s228 = sshll.u32 [#allocation5], 4
      %s229 = int_to_ptr.vmem [resolvable:$true] %s228
      %234 = dma.vmem_to_hbm [thread:$0]  %s229, 256, %s2, [#allocation4], 128, 128, 8
    $region17: #{tpu_custom_call.1} parent=1 // pred_fallthru
      _
    // Predicated region
    $region18: #{tpu_custom_call.1} parent=1 // pred_check
      _
    $region19: #{tpu_custom_call.1} parent=1 // pred_check_branch
      %236 = sbr.rel (0) target = $region21
    $region20: #{tpu_custom_call.1} parent=1 // pred_region
      %s238 = ssub.s32 16, 16
      %239 = vsyncadd [#allocation7], %s238
      %s241 = sshll.u32 [#allocation6], 4
      %s242 = int_to_ptr.vmem [resolvable:$true] %s241
      %244 = dma.vmem_to_hbm [thread:$0]  %s242, 16, %s3, [#allocation7]
    $region21: #{tpu_custom_call.1} parent=1 // pred_fallthru
      _
    // Predicated region
    $region22: #{tpu_custom_call.1} parent=1 // pred_check
      _
    $region23: #{tpu_custom_call.1} parent=1 // pred_check_branch
      %246 = sbr.rel (0) target = $region25
    $region24: #{tpu_custom_call.1} parent=1 // pred_region
      %247 = dma.done [#allocation4], 256
    $region25: #{tpu_custom_call.1} parent=1 // pred_fallthru
      _
    // Predicated region
    $region26: #{tpu_custom_call.1} parent=1 // pred_check
      _
    $region27: #{tpu_custom_call.1} parent=1 // pred_check_branch
      %249 = sbr.rel (0) target = $region29
    $region28: #{tpu_custom_call.1} parent=1 // pred_region
      %250 = dma.done [#allocation7], 16
    $region29: #{tpu_custom_call.1} parent=1 // pred_fallthru
      _
    %251 = vsyncpa [#allocation3], 1
    %252 = vsyncpa [#allocation4], 1
    %253 = vsyncpa [#allocation7], 1

</llo_original>
